<compile_context>
chip_gen: v5e
topology: v5e:2x2
jax: 0.10.0
libtpu: 0.0.40
codegen_flags: <defaults>
</compile_context>

<pallas_src>
import numpy as np

import jax
import jax.numpy as jnp
from jax.experimental import pallas as pl
from jax.experimental.pallas import tpu as pltpu


# ---------------------------------------------------------------------------
# helpers
# ---------------------------------------------------------------------------
def _round_up(x, m):
    return ((x + m - 1) // m) * m


def _physical_vmem_bytes():
    try:
        info = pltpu.get_tpu_info()
        v = getattr(info, "vmem_capacity_bytes", None)
        if v:
            return int(v)
    except Exception:
        pass
    return 64 * 1024 * 1024  # conservative (v7x per-core VMEM)


def make_colored_noise(rng, n, exponent):
    """Host-side colored-noise synthesis, mirroring the torch module (numpy FFT)."""
    white = np.fft.rfft(rng.standard_normal(n))
    f = np.fft.rfftfreq(n)
    psd = 1.0 / np.where(f == 0, np.inf, np.power(f, exponent / 2))
    psd = psd / np.sqrt(np.mean(psd ** 2))
    return np.fft.irfft(white * psd)  # length n for even n


# ---------------------------------------------------------------------------
# Fused single-pass kernel: square-sums + mix, whole array resident in VMEM
# ---------------------------------------------------------------------------
def _noise_fused_kernel(amp_ref, audio_ref, noise_ref, out_ref):
    # amp_ref: SMEM (1,) f32 holding 10 ** (-snr / 10)
    a = audio_ref[...].astype(jnp.float32)   # (C, N)
    cn = noise_ref[...].astype(jnp.float32)  # (1, N)
    sig_sq = jnp.sum(a * a)
    nse_sq = jnp.sum(cn * cn)
    is_zero = sig_sq == 0.0
    gain = jnp.where(is_zero, 1.0, jnp.sqrt(amp_ref[0] * sig_sq / nse_sq))
    keep = jnp.where(is_zero, 0.0, 1.0)
    # pure mul+add on the vector path (no per-element divide/sqrt)
    out_ref[...] = (a * keep + cn * gain).astype(out_ref.dtype)


# ---------------------------------------------------------------------------
# Two-pass fallback for inputs that do not fit in VMEM
# ---------------------------------------------------------------------------
def _sumsq_kernel(audio_ref, noise_ref, sig_ref, nse_ref):
    j = pl.program_id(0)
    a = audio_ref[...].astype(jnp.float32)
    n = noise_ref[...].astype(jnp.float32)
    sa = jnp.sum(a * a)
    sn = jnp.sum(n * n)

    @pl.when(j == 0)
    def _():
        sig_ref[0, 0] = sa
        nse_ref[0, 0] = sn

    @pl.when(j > 0)
    def _():
        sig_ref[0, 0] += sa
        nse_ref[0, 0] += sn


def _apply_kernel(coef_ref, audio_ref, noise_ref, out_ref):
    # coef_ref: SMEM (2,) f32 -> [keep, gain], precomputed once outside the kernel
    keep = coef_ref[0]
    gain = coef_ref[1]
    a = audio_ref[...].astype(jnp.float32)
    cn = noise_ref[...].astype(jnp.float32)
    out_ref[...] = (a * keep + cn * gain).astype(out_ref.dtype)


def _fused_call(audio, colored, amp, vmem_limit):
    C, N = audio.shape
    return pl.pallas_call(
        _noise_fused_kernel,
        out_shape=jax.ShapeDtypeStruct((C, N), audio.dtype),
        grid=(1,),
        in_specs=[
            pl.BlockSpec(memory_space=pltpu.MemorySpace.SMEM),  # amp scalar
            pl.BlockSpec((C, N), lambda i: (0, 0)),
            pl.BlockSpec((1, N), lambda i: (0, 0)),
        ],
        out_specs=pl.BlockSpec((C, N), lambda i: (0, 0)),
        compiler_params=pltpu.CompilerParams(
            dimension_semantics=("arbitrary",),
            vmem_limit_bytes=vmem_limit,
        ),
    )(amp, audio, colored)


def _two_pass_call(audio, colored, amp, vmem_limit, col_tile):
    C, N = audio.shape
    itemsize = int(np.dtype(audio.dtype).itemsize)

    if col_tile is None:
        # ~1 MiB lane-dense audio block per grid step
        col_tile = max(128, ((1 << 20) // (C * itemsize)) // 128 * 128)
    col_tile = min(col_tile, _round_up(N, 128))
    col_tile = max(128, (col_tile // 128) * 128)

    n_pad = _round_up(N, col_tile)
    if n_pad != N:
        # zero padding does not change the square-sums; padded outputs are sliced off
        audio_p = jnp.pad(audio, ((0, 0), (0, n_pad - N)))
        colored_p = jnp.pad(colored, ((0, 0), (0, n_pad - N)))
    else:
        audio_p, colored_p = audio, colored
    num_tiles = n_pad // col_tile

    # ---- pass 1: global square-sums (accumulator across the arbitrary axis) ----
    sig_sq, nse_sq = pl.pallas_call(
        _sumsq_kernel,
        out_shape=(
            jax.ShapeDtypeStruct((1, 1), jnp.float32),
            jax.ShapeDtypeStruct((1, 1), jnp.float32),
        ),
        grid=(num_tiles,),
        in_specs=[
            pl.BlockSpec((C, col_tile), lambda j: (0, j)),
            pl.BlockSpec((1, col_tile), lambda j: (0, j)),
        ],
        out_specs=(
            pl.BlockSpec((1, 1), lambda j: (0, 0)),
            pl.BlockSpec((1, 1), lambda j: (0, 0)),
        ),
        compiler_params=pltpu.CompilerParams(
            dimension_semantics=("arbitrary",),
            vmem_limit_bytes=vmem_limit,
        ),
    )(audio_p, colored_p)

    # tiny scalar math in plain JAX; hand the two coefficients to pass 2 via SMEM
    sig = sig_sq[0, 0]
    nse = nse_sq[0, 0]
    is_zero = sig == 0.0
    gain = jnp.where(is_zero, 1.0, jnp.sqrt(amp[0] * sig / nse))
    keep = jnp.where(is_zero, 0.0, 1.0)
    coef = jnp.stack([keep, gain]).astype(jnp.float32)  # (2,)

    # ---- pass 2: elementwise mix, large lane-dense tiles, parallel grid ----
    out_p = pl.pallas_call(
        _apply_kernel,
        out_shape=jax.ShapeDtypeStruct((C, n_pad), audio.dtype),
        grid=(num_tiles,),
        in_specs=[
            pl.BlockSpec(memory_space=pltpu.MemorySpace.SMEM),  # coef
            pl.BlockSpec((C, col_tile), lambda j: (0, j)),
            pl.BlockSpec((1, col_tile), lambda j: (0, j)),
        ],
        out_specs=pl.BlockSpec((C, col_tile), lambda j: (0, j)),
        compiler_params=pltpu.CompilerParams(
            dimension_semantics=("parallel",),
            vmem_limit_bytes=vmem_limit,
        ),
    )(coef, audio_p, colored_p)

    return out_p[:, :N]


def apply_noise_pallas(audio, colored, amp, *, force_two_pass=False, col_tile=None):
    """audio: (C, N); colored: (1, N); amp: (1,) f32 array holding 10**(-snr/10)."""
    assert audio.ndim == 2 and colored.shape == (1, audio.shape[1])
    C, N = audio.shape
    amp = jnp.asarray(amp, jnp.float32).reshape((1,))

    phys_vmem = _physical_vmem_bytes()
    vmem_limit = min(int(phys_vmem * 3 // 4), 96 * 1024 * 1024)
    fused_budget = phys_vmem // 4  # generation-aware: smaller on v7x (64 MiB VMEM)

    # f32 working-set estimate for the fused kernel (inputs + output + temporaries)
    fused_bytes = (3 * C * N + 2 * N) * 4
    if (not force_two_pass) and fused_bytes <= fused_budget:
        return _fused_call(audio, colored, amp, vmem_limit)
    return _two_pass_call(audio, colored, amp, vmem_limit, col_tile)


def noise_forward(audio, *, seed=0, exponent=0, min_snr_db=3.0, max_snr_db=30.0,
                  force_two_pass=False, col_tile=None):
    """End-to-end equivalent of Noise.forward (host-side noise synthesis + Pallas mix)."""
    rng = np.random.default_rng(seed)
    snr = float(rng.uniform(min_snr_db, max_snr_db))
    amp = jnp.asarray([10.0 ** (-snr / 10.0)], dtype=jnp.float32)
    n = audio.shape[1]
    colored = make_colored_noise(rng, n, exponent)
    assert colored.shape[0] == n, "audio length must be even (np.fft.irfft round trip)"
    colored = jnp.asarray(colored, dtype=audio.dtype)[None, :]
    return apply_noise_pallas(audio, colored, amp,
                              force_two_pass=force_two_pass, col_tile=col_tile)


# ---------------------------------------------------------------------------
# self-test
# ---------------------------------------------------------------------------
def _reference(audio, colored, amp_val):
    a = audio.astype(jnp.float32)
    c = colored.astype(jnp.float32)
    sig = jnp.sum(a * a)
    nse = jnp.sum(c * c)
    out = jnp.where(sig == 0.0,
                    jnp.broadcast_to(c, a.shape),
                    a + jnp.sqrt(amp_val * sig / nse) * c)
    return out.astype(audio.dtype)


if __name__ == "__main__":
    key = jax.random.PRNGKey(0)
    C, N = 2, 2048  # small (channels, samples); N even as the module requires
    audio = jax.random.normal(key, (C, N), dtype=jnp.float32)

    # deterministic module randomness (same order of draws as noise_forward(seed=0))
    rng = np.random.default_rng(0)
    snr = float(rng.uniform(3.0, 30.0))
    amp_val = 10.0 ** (-snr / 10.0)
    colored = jnp.asarray(make_colored_noise(rng, N, exponent=0), jnp.float32)[None, :]
    amp = jnp.asarray([amp_val], jnp.float32)

    # fused single-pass path
    out_fused = jax.block_until_ready(apply_noise_pallas(audio, colored, amp))
    # two-pass fallback path (forced; tile chosen to exercise multi-tile + padding)
    out_two = jax.block_until_ready(
        apply_noise_pallas(audio, colored, amp, force_two_pass=True, col_tile=640))
    # end-to-end API (same seed -> same draws)
    out_api = jax.block_until_ready(noise_forward(audio, seed=0))
    # zero-signal branch (torch returns the noise itself)
    out_zero = jax.block_until_ready(
        apply_noise_pallas(jnp.zeros_like(audio), colored, amp))

    ref = _reference(audio, colored, jnp.float32(amp_val))
    ref_zero = _reference(jnp.zeros_like(audio), colored, jnp.float32(amp_val))

    assert out_fused.shape == audio.shape and out_fused.dtype == audio.dtype
    assert jnp.allclose(out_fused, ref, atol=1e-4, rtol=1e-4)
    assert jnp.allclose(out_two, ref, atol=1e-4, rtol=1e-4)
    assert jnp.allclose(out_api, ref, atol=1e-4, rtol=1e-4)
    assert jnp.allclose(out_zero, ref_zero, atol=1e-4, rtol=1e-4)

    print("KERNEL_OK")
</pallas_src>

<mosaic_0001>
module attributes {stable_mosaic.version = 11 : i64} {
  func.func @_noise_fused_kernel(%arg0: i32, %arg1: memref<1xf32, #tpu.memory_space<smem>>, %arg2: memref<2x2048xf32, #tpu.memory_space<vmem>>, %arg3: memref<1x2048xf32, #tpu.memory_space<vmem>>, %arg4: memref<2x2048xf32, #tpu.memory_space<vmem>>) attributes {dimension_semantics = [#tpu.dimension_semantics<arbitrary>], iteration_bounds = array<i64: 1>, scalar_prefetch = 0 : i64, scratch_operands = 0 : i64, tpu.core_type = #tpu.core_type<tc>, window_params = [{transform_indices = @transform_0, window_bounds = array<i64: 1>}, {pipeline_mode = #tpu.pipeline_mode<synchronous>, transform_indices = @transform_1, window_bounds = array<i64: 2, 2048>}, {pipeline_mode = #tpu.pipeline_mode<synchronous>, transform_indices = @transform_2, window_bounds = array<i64: 1, 2048>}, {pipeline_mode = #tpu.pipeline_mode<synchronous>, transform_indices = @transform_3, window_bounds = array<i64: 2, 2048>}]} {
    %c0 = arith.constant 0 : index
    %c0_0 = arith.constant 0 : index
    %0 = vector.load %arg2[%c0, %c0_0] : memref<2x2048xf32, #tpu.memory_space<vmem>>, vector<2x2048xf32>
    %c0_1 = arith.constant 0 : index
    %c0_2 = arith.constant 0 : index
    %1 = vector.load %arg3[%c0_1, %c0_2] : memref<1x2048xf32, #tpu.memory_space<vmem>>, vector<1x2048xf32>
    %2 = arith.mulf %0, %0 : vector<2x2048xf32>
    %3 = vector.shape_cast %2 : vector<2x2048xf32> to vector<1x2x2048xf32>
    %cst = arith.constant dense<0.000000e+00> : vector<1xf32>
    %4 = vector.multi_reduction <add>, %3, %cst [1, 2] : vector<1x2x2048xf32> to vector<1xf32>
    %5 = vector.shape_cast %4 : vector<1xf32> to vector<1x1x1xf32>
    %6 = vector.extract %5[0, 0, 0] : f32 from vector<1x1x1xf32>
    %7 = arith.mulf %1, %1 : vector<1x2048xf32>
    %8 = vector.shape_cast %7 : vector<1x2048xf32> to vector<1x1x2048xf32>
    %cst_3 = arith.constant dense<0.000000e+00> : vector<1xf32>
    %9 = vector.multi_reduction <add>, %8, %cst_3 [1, 2] : vector<1x1x2048xf32> to vector<1xf32>
    %10 = vector.shape_cast %9 : vector<1xf32> to vector<1x1x1xf32>
    %11 = vector.extract %10[0, 0, 0] : f32 from vector<1x1x1xf32>
    %cst_4 = arith.constant 0.000000e+00 : f32
    %12 = arith.cmpf oeq, %6, %cst_4 : f32
    %c0_5 = arith.constant 0 : index
    %13 = memref.load %arg1[%c0_5] : memref<1xf32, #tpu.memory_space<smem>>
    %14 = arith.mulf %13, %6 : f32
    %15 = arith.divf %14, %11 : f32
    %16 = math.sqrt %15 : f32
    %cst_6 = arith.constant 1.000000e+00 : f32
    %17 = arith.select %12, %cst_6, %16 : f32
    %cst_7 = arith.constant 0.000000e+00 : f32
    %cst_8 = arith.constant 1.000000e+00 : f32
    %18 = arith.select %12, %cst_7, %cst_8 : f32
    %19 = vector.broadcast %18 : f32 to vector<2x2048xf32>
    %20 = arith.mulf %0, %19 : vector<2x2048xf32>
    %21 = vector.broadcast %17 : f32 to vector<1x2048xf32>
    %22 = arith.mulf %1, %21 : vector<1x2048xf32>
    %23 = vector.broadcast %22 : vector<1x2048xf32> to vector<2x2048xf32>
    %24 = arith.addf %20, %23 : vector<2x2048xf32>
    %c0_9 = arith.constant 0 : index
    %c0_10 = arith.constant 0 : index
    %25 = vector.load %arg4[%c0_9, %c0_10] : memref<2x2048xf32, #tpu.memory_space<vmem>>, vector<2x2048xf32>
    tpu.vector_store %arg4[%c0_9, %c0_10], %24 {strides = array<i32>} : memref<2x2048xf32, #tpu.memory_space<vmem>>, vector<2x2048xf32>,
    return
  }
  func.func @transform_0(%arg0: i32) -> i32 {
    %c0_i32 = arith.constant 0 : i32
    %c0_i32_0 = arith.constant 0 : i32
    return %c0_i32 : i32
  }
  func.func @transform_1(%arg0: i32) -> (i32, i32) {
    %c0_i32 = arith.constant 0 : i32
    %c0_i32_0 = arith.constant 0 : i32
    %c0_i32_1 = arith.constant 0 : i32
    return %c0_i32, %c0_i32_0 : i32, i32
  }
  func.func @transform_2(%arg0: i32) -> (i32, i32) {
    %c0_i32 = arith.constant 0 : i32
    %c0_i32_0 = arith.constant 0 : i32
    %c0_i32_1 = arith.constant 0 : i32
    return %c0_i32, %c0_i32_0 : i32, i32
  }
  func.func @transform_3(%arg0: i32) -> (i32, i32) {
    %c0_i32 = arith.constant 0 : i32
    %c0_i32_0 = arith.constant 0 : i32
    %c0_i32_1 = arith.constant 0 : i32
    return %c0_i32, %c0_i32_0 : i32, i32
  }
}

</mosaic_0001>

<llo_original>
// kernel: tpu_custom_call.1
$region0: #{tpu_custom_call.1}
  #allocation0 [shape = 'u32[]', space=smem, size = 0x4, offset = 0x4, fixed_abs, tag = 'smem constant byte address 0x4 - core index']
  #allocation1 [shape = 'u32[72,128]{1,0:T(1,128)}', space=vmem, size = 0x9000, scoped, tag = 'internal scratch']
  #allocation2 [shape = 'f32[1]{0:T(128)S(6)}', space=smem, size = 0x200, scoped, tag = 'scoped memory for tpu_custom_call.1']
  %s0 = inlined_call_operand.<no memory space> [shape: f32[1], index: 0, kind: input, shape index: {}]
  %s1 = inlined_call_operand.hbm [shape: f32[2,2048], index: 1, kind: input, shape index: {}]
  %s2 = inlined_call_operand.hbm [shape: f32[1,2048], index: 2, kind: input, shape index: {}]
  %s3 = inlined_call_operand.hbm [shape: f32[2,2048], index: 3, kind: output, shape index: {}]
  %s4 = sld [smem:[#allocation0]]
  $region30: #{tpu_custom_call.1} parent=0
    _
  %s6 = ssub.s32 1, %s4
  %s7 = scalar_select 0, %s6, %s4
  %8 = sst [smem:[#allocation2]] %s0
  $region1: #{tpu_custom_call.1} parent=0
    #allocation3 [shape = 'u8[16384]{0}', space=vmem, size = 0x4000, scoped, tag = 'input window, operand 1, single buffered']
    #allocation4 [shape = 's32[1]{0}', space=sflag, size = 0x4, scoped, tag = 'scoped memory for tpu_custom_call.1']
    #allocation5 [shape = 's32[1]{0}', space=sflag, size = 0x4, scoped, tag = 'scoped memory for tpu_custom_call.1']
    #allocation6 [shape = 'u8[8192]{0}', space=vmem, size = 0x2000, scoped, tag = 'input window, operand 2, single buffered']
    #allocation7 [shape = 's32[1]{0}', space=sflag, size = 0x4, scoped, tag = 'scoped memory for tpu_custom_call.1']
    #allocation8 [shape = 'u8[16384]{0}', space=vmem, size = 0x4000, scoped, tag = 'output window, operand 0, single buffered']
    %9 = vsyncpa [#allocation4], 0
    %10 = vsyncpa [#allocation7], 0
    %11 = vsyncpa [#allocation5], 0
    // Predicated region
    $region2: #{tpu_custom_call.1} parent=1 // pred_check
      _
    $region3: #{tpu_custom_call.1} parent=1 // pred_check_branch
      %13 = sbr.rel (0) target = $region5
    $region4: #{tpu_custom_call.1} parent=1 // pred_region
      _
    $region5: #{tpu_custom_call.1} parent=1 // pred_fallthru
      _
    // Predicated region
    $region6: #{tpu_custom_call.1} parent=1 // pred_check
      _
    $region7: #{tpu_custom_call.1} parent=1 // pred_check_branch
      %15 = sbr.rel (0) target = $region9
    $region8: #{tpu_custom_call.1} parent=1 // pred_region
      %17 = vsyncadd [#allocation4], 0
      %s19 = sshll.u32 %s1, 4
      %s20 = int_to_ptr.hbm [resolvable:$true] %s19
      %s21 = sshll.u32 [#allocation3], 4
      %s22 = int_to_ptr.vmem [resolvable:$true] %s21
      %24 = dma.hbm_to_vmem [thread:$0]  %s20, 512, %s22, [#allocation4]
    $region9: #{tpu_custom_call.1} parent=1 // pred_fallthru
      _
    // Predicated region
    $region10: #{tpu_custom_call.1} parent=1 // pred_check
      _
    $region11: #{tpu_custom_call.1} parent=1 // pred_check_branch
      %26 = sbr.rel (0) target = $region13
    $region12: #{tpu_custom_call.1} parent=1 // pred_region
      %28 = vsyncadd [#allocation7], 0
      %s30 = sshll.u32 %s2, 4
      %s31 = int_to_ptr.hbm [resolvable:$true] %s30
      %s32 = sshll.u32 [#allocation6], 4
      %s33 = int_to_ptr.vmem [resolvable:$true] %s32
      %35 = dma.hbm_to_vmem [thread:$0]  %s31, 256, %s33, [#allocation7]
    $region13: #{tpu_custom_call.1} parent=1 // pred_fallthru
      _
    // Predicated region
    $region14: #{tpu_custom_call.1} parent=1 // pred_check
      _
    $region15: #{tpu_custom_call.1} parent=1 // pred_check_branch
      %37 = sbr.rel (0) target = $region17
    $region16: #{tpu_custom_call.1} parent=1 // pred_region
      %39 = dma.done [#allocation4], 512
    $region17: #{tpu_custom_call.1} parent=1 // pred_fallthru
      _
    // Predicated region
    $region18: #{tpu_custom_call.1} parent=1 // pred_check
      _
    $region19: #{tpu_custom_call.1} parent=1 // pred_check_branch
      %41 = sbr.rel (0) target = $region21
    $region20: #{tpu_custom_call.1} parent=1 // pred_region
      %43 = dma.done [#allocation7], 256
    $region21: #{tpu_custom_call.1} parent=1 // pred_fallthru
      _
    %v44 = vld [vmem:[#allocation3] sm:$0xff]
    %v45 = vld [vmem:[#allocation3 + $0x8] sm:$0xff]
    %v46 = vld [vmem:[#allocation3 + $0x10] sm:$0xff]
    %v47 = vld [vmem:[#allocation3 + $0x18] sm:$0xff]
    %v48 = vld [vmem:[#allocation6] sm:$0xff]
    %v49 = vld [vmem:[#allocation6 + $0x8] sm:$0xff]
    %v50 = vmul.f32 %v44, %v44
    %v51 = vmul.f32 %v45, %v45
    %v52 = vmul.f32 %v46, %v46
    %v53 = vmul.f32 %v47, %v47
    %58 = vst [vmem:[#allocation1] ss:$4 sm:$0xff] %v50
    %s59 = scalar_lea.vmem [#allocation1], 32
    %60 = vst [vmem:[%s59] ss:$4 sm:$0xff] %v51
    %v61 = vld.sshfl [vmem:[#allocation1] sm:$0xff pattern:$0x73625140]
    %v62 = vld.sshfl [vmem:[#allocation1 + $0x8] sm:$0xff pattern:$0x73625140]
    %v63 = vld.sshfl [vmem:[#allocation1 + $0x10] sm:$0xff pattern:$0x73625140]
    %v64 = vld.sshfl [vmem:[#allocation1 + $0x18] sm:$0xff pattern:$0x73625140]
    %v65 = vld.sshfl [vmem:[#allocation1 + $0x20] sm:$0xff pattern:$0x73625140]
    %v66 = vld.sshfl [vmem:[#allocation1 + $0x28] sm:$0xff pattern:$0x73625140]
    %v67 = vld.sshfl [vmem:[#allocation1 + $0x30] sm:$0xff pattern:$0x73625140]
    %v68 = vld.sshfl [vmem:[#allocation1 + $0x38] sm:$0xff pattern:$0x73625140]
    %69 = vst [vmem:[#allocation1] ss:$4 sm:$0xff] %v52
    %70 = vst [vmem:[%s59] ss:$4 sm:$0xff] %v53
    %v71 = vld.sshfl [vmem:[#allocation1] sm:$0xff pattern:$0x73625140]
    %v72 = vld.sshfl [vmem:[#allocation1 + $0x8] sm:$0xff pattern:$0x73625140]
    %v73 = vld.sshfl [vmem:[#allocation1 + $0x10] sm:$0xff pattern:$0x73625140]
    %v74 = vld.sshfl [vmem:[#allocation1 + $0x18] sm:$0xff pattern:$0x73625140]
    %v75 = vld.sshfl [vmem:[#allocation1 + $0x20] sm:$0xff pattern:$0x73625140]
    %v76 = vld.sshfl [vmem:[#allocation1 + $0x28] sm:$0xff pattern:$0x73625140]
    %v77 = vld.sshfl [vmem:[#allocation1 + $0x30] sm:$0xff pattern:$0x73625140]
    %v78 = vld.sshfl [vmem:[#allocation1 + $0x38] sm:$0xff pattern:$0x73625140]
    %vm95 = vcmask 1041408
    %v96 = vsel %vm95, %v61, 0.0
    %v97 = vsel %vm95, %v62, 0.0
    %v98 = vadd.f32 %v96, %v97
    %v99 = vsel %vm95, %v63, 0.0
    %v100 = vadd.f32 %v98, %v99
    %v101 = vsel %vm95, %v64, 0.0
    %v102 = vadd.f32 %v100, %v101
    %v103 = vsel %vm95, %v65, 0.0
    %v104 = vadd.f32 %v102, %v103
    %v105 = vsel %vm95, %v66, 0.0
    %v106 = vadd.f32 %v104, %v105
    %v107 = vsel %vm95, %v67, 0.0
    %v108 = vadd.f32 %v106, %v107
    %v109 = vsel %vm95, %v68, 0.0
    %v110 = vadd.f32 %v108, %v109
    %v111 = vsel %vm95, %v71, 0.0
    %v112 = vadd.f32 %v110, %v111
    %v113 = vsel %vm95, %v72, 0.0
    %v114 = vadd.f32 %v112, %v113
    %v115 = vsel %vm95, %v73, 0.0
    %v116 = vadd.f32 %v114, %v115
    %v117 = vsel %vm95, %v74, 0.0
    %v118 = vadd.f32 %v116, %v117
    %v119 = vsel %vm95, %v75, 0.0
    %v120 = vadd.f32 %v118, %v119
    %v121 = vsel %vm95, %v76, 0.0
    %v122 = vadd.f32 %v120, %v121
    %v123 = vsel %vm95, %v77, 0.0
    %v124 = vadd.f32 %v122, %v123
    %v125 = vsel %vm95, %v78, 0.0
    %v126 = vadd.f32 %v124, %v125
    %127 = vadd.xlane.f32.xlu0 %v126
    %v128 = vpop.xlane.xlu0 %127
    %v129 = vrot.slane %v128, 4
    %v130 = vadd.f32 %v128, %v129
    %v131 = vrot.slane %v130, 2
    %v132 = vadd.f32 %v130, %v131
    %v133 = vrot.slane %v132, 1
    %v134 = vadd.f32 %v132, %v133
    %s135 = vtos %v134
    %v136 = vmul.f32 %v48, %v48
    %v137 = vmul.f32 %v49, %v49
    %v140 = vperm.slane %v136, 0
    %v141 = vperm.slane %v136, 1
    %v142 = vperm.slane %v136, 2
    %v143 = vperm.slane %v136, 3
    %v144 = vperm.slane %v136, 4
    %v145 = vperm.slane %v136, 5
    %v146 = vperm.slane %v136, 6
    %v147 = vperm.slane %v136, 7
    %v148 = vperm.slane %v137, 0
    %v149 = vperm.slane %v137, 1
    %v150 = vperm.slane %v137, 2
    %v151 = vperm.slane %v137, 3
    %v152 = vperm.slane %v137, 4
    %v153 = vperm.slane %v137, 5
    %v154 = vperm.slane %v137, 6
    %v155 = vperm.slane %v137, 7
    %vm172 = vcmask 1040384
    %v173 = vsel %vm172, %v140, 0.0
    %v174 = vsel %vm172, %v141, 0.0
    %v175 = vadd.f32 %v173, %v174
    %v176 = vsel %vm172, %v142, 0.0
    %v177 = vadd.f32 %v175, %v176
    %v178 = vsel %vm172, %v143, 0.0
    %v179 = vadd.f32 %v177, %v178
    %v180 = vsel %vm172, %v144, 0.0
    %v181 = vadd.f32 %v179, %v180
    %v182 = vsel %vm172, %v145, 0.0
    %v183 = vadd.f32 %v181, %v182
    %v184 = vsel %vm172, %v146, 0.0
    %v185 = vadd.f32 %v183, %v184
    %v186 = vsel %vm172, %v147, 0.0
    %v187 = vadd.f32 %v185, %v186
    %v188 = vsel %vm172, %v148, 0.0
    %v189 = vadd.f32 %v187, %v188
    %v190 = vsel %vm172, %v149, 0.0
    %v191 = vadd.f32 %v189, %v190
    %v192 = vsel %vm172, %v150, 0.0
    %v193 = vadd.f32 %v191, %v192
    %v194 = vsel %vm172, %v151, 0.0
    %v195 = vadd.f32 %v193, %v194
    %v196 = vsel %vm172, %v152, 0.0
    %v197 = vadd.f32 %v195, %v196
    %v198 = vsel %vm172, %v153, 0.0
    %v199 = vadd.f32 %v197, %v198
    %v200 = vsel %vm172, %v154, 0.0
    %v201 = vadd.f32 %v199, %v200
    %v202 = vsel %vm172, %v155, 0.0
    %v203 = vadd.f32 %v201, %v202
    %204 = vadd.xlane.f32.xlu0 %v203
    %v205 = vpop.xlane.xlu0 %204
    %v206 = vrot.slane %v205, 4
    %v207 = vadd.f32 %v205, %v206
    %v208 = vrot.slane %v207, 2
    %v209 = vadd.f32 %v207, %v208
    %v210 = vrot.slane %v209, 1
    %v211 = vadd.f32 %v209, %v210
    %s212 = vtos %v211
    %p213 = scmp.eq.f32.partialorder %s135, 0.0
    %s214 = sld [smem:[#allocation2]]
    %s215 = smul.f32 %s214, %s135
    %v216 = vstv %s212
    %v217 = vrcp.pop %v216
    %v218 = vmul.f32 %v216, %v217
    %v219 = vsub.f32 1.0, %v218
    %v220 = vmul.f32 %v217, %v219
    %v221 = vadd.f32 %v217, %v220
    %vm222 = vweird.f32 %v216
    %vm223 = vweird.f32 %v217
    %vm224 = vmor %vm222, %vm223
    %v225 = vsel %vm224, %v217, %v221
    %v226 = vand.u32 2147483647, %v216
    %vm227 = vcmp.eq.f32.partialorder %v226, 8.507059e+37
    %v228 = vand.u32 %v216, 2147483648
    %v229 = vor.u32 1.1754944e-38, %v228
    %v230 = vsel %vm227, %v229, %v225
    %s231 = vtos %v230
    %s232 = smul.f32 %s215, %s231
    %v233 = vstv %s232
    %v234 = vrsqrt.pop %v233
    %v235 = vmul.f32 %v234, %v233
    %v236 = vmul.f32 %v235, %v234
    %v237 = vmul.f32 0.5, %v236
    %v238 = vsub.f32 1.5, %v237
    %v239 = vmul.f32 %v234, %v238
    %v240 = vmul.f32 %v233, %v239
    %vm241 = vcmp.eq.f32.partialorder %v233, inf
    %v242 = vsel %vm241, %v233, %v240
    %vm243 = vcmp.eq.f32.partialorder %v233, 0.0
    %v244 = vand.u32 %v233, 2147483648
    %v245 = vsel %vm243, %v244, %v242
    %s246 = vtos %v245
    %s247 = scalar_select %p213, 1.0, %s246
    %s248 = scalar_select %p213, 0.0, 1.0
    %v249 = vstv %s248
    %v250 = vmul.f32 %v44, %v249
    %v251 = vmul.f32 %v45, %v249
    %v252 = vmul.f32 %v46, %v249
    %v253 = vmul.f32 %v47, %v249
    %v254 = vstv %s247
    %v255 = vmul.f32 %v48, %v254
    %v256 = vmul.f32 %v49, %v254
    %v259 = vperm.slane %v255, 0
    %v260 = vperm.slane %v255, 1
    %v261 = vperm.slane %v255, 2
    %v262 = vperm.slane %v255, 3
    %v263 = vperm.slane %v255, 4
    %v264 = vperm.slane %v255, 5
    %v265 = vperm.slane %v255, 6
    %v266 = vperm.slane %v255, 7
    %v267 = vperm.slane %v256, 0
    %v268 = vperm.slane %v256, 1
    %v269 = vperm.slane %v256, 2
    %v270 = vperm.slane %v256, 3
    %v271 = vperm.slane %v256, 4
    %v272 = vperm.slane %v256, 5
    %v273 = vperm.slane %v256, 6
    %v274 = vperm.slane %v256, 7
    %v275 = vrot.slane %v260, 6
    %v276 = vrot.slane %v261, 4
    %v277 = vrot.slane %v262, 2
    %v278 = vrot.slane %v264, 6
    %v279 = vrot.slane %v265, 4
    %v280 = vrot.slane %v266, 2
    %v281 = vrot.slane %v268, 6
    %v282 = vrot.slane %v269, 4
    %v283 = vrot.slane %v270, 2
    %v284 = vrot.slane %v272, 6
    %v285 = vrot.slane %v273, 4
    %v286 = vrot.slane %v274, 2
    %v287 = vsel %vm95, %v259, %v275
    %vm288 = vcmask 1045508
    %v289 = vsel %vm288, %v276, %v277
    %vm290 = vcmask 1043456
    %v291 = vsel %vm290, %v287, %v289
    %v292 = vsel %vm95, %v263, %v278
    %v293 = vsel %vm288, %v279, %v280
    %v294 = vsel %vm290, %v292, %v293
    %v295 = vsel %vm95, %v267, %v281
    %v296 = vsel %vm288, %v282, %v283
    %v297 = vsel %vm290, %v295, %v296
    %v298 = vsel %vm95, %v271, %v284
    %v299 = vsel %vm288, %v285, %v286
    %v300 = vsel %vm290, %v298, %v299
    %v305 = vadd.f32 %v250, %v291
    %v306 = vadd.f32 %v251, %v294
    %v307 = vadd.f32 %v252, %v297
    %v308 = vadd.f32 %v253, %v300
    %309 = vst [vmem:[#allocation8] sm:$0xff] %v305
    %310 = vst [vmem:[#allocation8 + $0x8] sm:$0xff] %v306
    %311 = vst [vmem:[#allocation8 + $0x10] sm:$0xff] %v307
    %312 = vst [vmem:[#allocation8 + $0x18] sm:$0xff] %v308
    // Predicated region
    $region22: #{tpu_custom_call.1} parent=1 // pred_check
      _
    $region23: #{tpu_custom_call.1} parent=1 // pred_check_branch
      %314 = sbr.rel (0) target = $region25
    $region24: #{tpu_custom_call.1} parent=1 // pred_region
      %316 = vsyncadd [#allocation5], 0
      %s318 = sshll.u32 [#allocation8], 4
      %s319 = int_to_ptr.vmem [resolvable:$true] %s318
      %s320 = sshll.u32 %s3, 4
      %s321 = int_to_ptr.hbm [resolvable:$true] %s320
      %323 = dma.vmem_to_hbm [thread:$0]  %s319, 512, %s321, [#allocation5]
    $region25: #{tpu_custom_call.1} parent=1 // pred_fallthru
      _
    // Predicated region
    $region26: #{tpu_custom_call.1} parent=1 // pred_check
      _
    $region27: #{tpu_custom_call.1} parent=1 // pred_check_branch
      %325 = sbr.rel (0) target = $region29
    $region28: #{tpu_custom_call.1} parent=1 // pred_region
      %327 = dma.done [#allocation5], 512
    $region29: #{tpu_custom_call.1} parent=1 // pred_fallthru
      _
    %328 = vsyncpa [#allocation4], 1
    %329 = vsyncpa [#allocation7], 1
    %330 = vsyncpa [#allocation5], 1

</llo_original>
